<compile_context>
chip_gen: v6e
topology: v6e:2x2x1
jax: 0.10.0
libtpu: 0.0.40
codegen_flags: <defaults>
</compile_context>

<pallas_src>
import jax
import jax.numpy as jnp
from jax.experimental import pallas as pl
from jax.experimental.pallas import tpu as pltpu


def _make_huber_kernel(beta: float):
    beta = float(beta)
    half_inv_beta = 0.5 / beta
    half_beta = 0.5 * beta

    def huber_kernel(x_ref, t_ref, o_ref):
        x = x_ref[...].astype(jnp.float32)
        t = t_ref[...].astype(jnp.float32)
        l1 = jnp.abs(x - t)
        quad = l1 * l1 * half_inv_beta          # 0.5 * l1**2 / beta, no divide
        lin = l1 - half_beta
        o_ref[...] = jnp.where(l1 < beta, quad, lin).astype(o_ref.dtype)

    return huber_kernel


def huber_loss(inputs, targets, beta=1.0):
    assert inputs.shape == targets.shape, "inputs/targets must match"
    orig_shape = inputs.shape
    dtype = inputs.dtype

    n = 1
    for d in orig_shape:
        n *= d

    x = jnp.ravel(inputs)
    t = jnp.ravel(targets)

    # Pick the widest lane count that divides n exactly (no pad copy needed).
    lanes = None
    for cand in (512, 256, 128):
        if n % cand == 0:
            lanes = cand
            break
    if lanes is None:
        # Rare ragged case: pad to a multiple of 128 (at most 127 elements).
        # TODO(synk): handle the ragged tail with in-kernel masking instead of
        # a wrapper-side pad/slice copy.
        lanes = 128
        n_pad = ((n + lanes - 1) // lanes) * lanes
        x = jnp.pad(x, (0, n_pad - n))
        t = jnp.pad(t, (0, n_pad - n))
    else:
        n_pad = n

    rows = n_pad // lanes
    x2 = x.reshape(rows, lanes)
    t2 = t.reshape(rows, lanes)

    # ~2 MiB per operand per block. 3 operands x 2 pipeline buffers x 2 MiB
    # = 12 MiB total VMEM -> fits every generation's default scoped limit.
    target_block_bytes = 2 * 1024 * 1024
    bytes_per_row = lanes * jnp.dtype(dtype).itemsize
    block_rows = (target_block_bytes // bytes_per_row) // 8 * 8
    block_rows = max(8, block_rows)
    if block_rows >= rows:
        # Full-extent block along rows (allowed even if rows % 8 != 0).
        block_rows = rows

    grid = (pl.cdiv(rows, block_rows),)

    out2 = pl.pallas_call(
        _make_huber_kernel(beta),
        out_shape=jax.ShapeDtypeStruct((rows, lanes), dtype),
        grid=grid,
        in_specs=[
            pl.BlockSpec((block_rows, lanes), lambda i: (i, 0)),
            pl.BlockSpec((block_rows, lanes), lambda i: (i, 0)),
        ],
        out_specs=pl.BlockSpec((block_rows, lanes), lambda i: (i, 0)),
        compiler_params=pltpu.CompilerParams(
            dimension_semantics=("parallel",),
        ),
    )(x2, t2)

    if n_pad != n:
        return out2.reshape(-1)[:n].reshape(orig_shape)
    return out2.reshape(orig_shape)


def huber_loss_ref(inputs, targets, beta=1.0):
    l1 = jnp.abs(inputs - targets)
    return jnp.where(l1 < beta, 0.5 * l1 * l1 / beta, l1 - 0.5 * beta)


if __name__ == "__main__":
    key = jax.random.PRNGKey(0)
    k1, k2 = jax.random.split(key)
    # Small shapes consistent with the module (pure elementwise): NCHW [2,4,16,16]
    x = jax.random.normal(k1, (2, 4, 16, 16), dtype=jnp.float32) * 2.0
    t = jax.random.normal(k2, (2, 4, 16, 16), dtype=jnp.float32) * 2.0

    out = huber_loss(x, t, beta=1.0)
    out = jax.block_until_ready(out)

    ref = huber_loss_ref(x, t, beta=1.0)
    assert out.shape == ref.shape and out.dtype == ref.dtype
    assert jnp.max(jnp.abs(out - ref)) < 1e-5

    print("KERNEL_OK")
</pallas_src>

<mosaic_0001>
module attributes {stable_mosaic.version = 11 : i64} {
  func.func @huber_kernel(%arg0: i32, %arg1: memref<4x512xf32, #tpu.memory_space<vmem>>, %arg2: memref<4x512xf32, #tpu.memory_space<vmem>>, %arg3: memref<4x512xf32, #tpu.memory_space<vmem>>) attributes {dimension_semantics = [#tpu.dimension_semantics<parallel>], iteration_bounds = array<i64: 1>, scalar_prefetch = 0 : i64, scratch_operands = 0 : i64, tpu.core_type = #tpu.core_type<tc>, window_params = [{transform_indices = @transform_0, window_bounds = array<i64: 4, 512>}, {transform_indices = @transform_1, window_bounds = array<i64: 4, 512>}, {transform_indices = @transform_2, window_bounds = array<i64: 4, 512>}]} {
    %c0 = arith.constant 0 : index
    %c0_0 = arith.constant 0 : index
    %0 = vector.load %arg1[%c0, %c0_0] : memref<4x512xf32, #tpu.memory_space<vmem>>, vector<4x512xf32>
    %c0_1 = arith.constant 0 : index
    %c0_2 = arith.constant 0 : index
    %1 = vector.load %arg2[%c0_1, %c0_2] : memref<4x512xf32, #tpu.memory_space<vmem>>, vector<4x512xf32>
    %2 = arith.subf %0, %1 : vector<4x512xf32>
    %3 = math.absf %2 : vector<4x512xf32>
    %4 = arith.mulf %3, %3 : vector<4x512xf32>
    %cst = arith.constant 5.000000e-01 : f32
    %5 = vector.broadcast %cst : f32 to vector<4x512xf32>
    %6 = arith.mulf %4, %5 : vector<4x512xf32>
    %cst_3 = arith.constant 5.000000e-01 : f32
    %7 = vector.broadcast %cst_3 : f32 to vector<4x512xf32>
    %8 = arith.subf %3, %7 : vector<4x512xf32>
    %cst_4 = arith.constant 1.000000e+00 : f32
    %9 = vector.broadcast %cst_4 : f32 to vector<4x512xf32>
    %10 = arith.cmpf olt, %3, %9 : vector<4x512xf32>
    %11 = arith.select %10, %6, %8 : vector<4x512xi1>, vector<4x512xf32>
    %c0_5 = arith.constant 0 : index
    %c0_6 = arith.constant 0 : index
    %12 = vector.load %arg3[%c0_5, %c0_6] : memref<4x512xf32, #tpu.memory_space<vmem>>, vector<4x512xf32>
    tpu.vector_store %arg3[%c0_5, %c0_6], %11 {strides = array<i32>} : memref<4x512xf32, #tpu.memory_space<vmem>>, vector<4x512xf32>,
    return
  }
  func.func @transform_0(%arg0: i32) -> (i32, i32) {
    %c0_i32 = arith.constant 0 : i32
    %c0_i32_0 = arith.constant 0 : i32
    return %arg0, %c0_i32 : i32, i32
  }
  func.func @transform_1(%arg0: i32) -> (i32, i32) {
    %c0_i32 = arith.constant 0 : i32
    %c0_i32_0 = arith.constant 0 : i32
    return %arg0, %c0_i32 : i32, i32
  }
  func.func @transform_2(%arg0: i32) -> (i32, i32) {
    %c0_i32 = arith.constant 0 : i32
    %c0_i32_0 = arith.constant 0 : i32
    return %arg0, %c0_i32 : i32, i32
  }
}

</mosaic_0001>

<llo_original>
// kernel: tpu_custom_call.1
$region0: #{tpu_custom_call.1}
  #allocation0 [shape = 'u32[]', space=smem, size = 0x4, offset = 0x4, fixed_abs, tag = 'smem constant byte address 0x4 - core index']
  #allocation1 [shape = 'u32[144,128]{1,0:T(1,128)}', space=vmem, size = 0x12000, scoped, tag = 'internal scratch']
  %s0 = inlined_call_operand.hbm [shape: f32[4,512], index: 0, kind: input, shape index: {}]
  %s1 = inlined_call_operand.hbm [shape: f32[4,512], index: 1, kind: input, shape index: {}]
  %s2 = inlined_call_operand.hbm [shape: f32[4,512], index: 2, kind: output, shape index: {}]
  %s3 = sld [smem:[#allocation0]]
  $region26: #{tpu_custom_call.1} parent=0
    _
  %s5 = ssub.s32 1, %s3
  %s6 = scalar_select 0, %s5, %s3
  $region1: #{tpu_custom_call.1} parent=0
    #allocation2 [shape = 'u8[8192]{0}', space=vmem, size = 0x2000, scoped, tag = 'input window, operand 0, single buffered']
    #allocation3 [shape = 's32[1]{0}', space=sflag, size = 0x4, scoped, tag = 'scoped memory for tpu_custom_call.1']
    #allocation4 [shape = 's32[1]{0}', space=sflag, size = 0x4, scoped, tag = 'scoped memory for tpu_custom_call.1']
    #allocation5 [shape = 'u8[8192]{0}', space=vmem, size = 0x2000, scoped, tag = 'input window, operand 1, single buffered']
    #allocation6 [shape = 's32[1]{0}', space=sflag, size = 0x4, scoped, tag = 'scoped memory for tpu_custom_call.1']
    #allocation7 [shape = 'u8[8192]{0}', space=vmem, size = 0x2000, scoped, tag = 'output window, operand 0, single buffered']
    %7 = vsyncpa [#allocation3], 0
    %8 = vsyncpa [#allocation6], 0
    %9 = vsyncpa [#allocation4], 0
    // Predicated region
    $region2: #{tpu_custom_call.1} parent=1 // pred_check
      _
    $region3: #{tpu_custom_call.1} parent=1 // pred_check_branch
      %11 = sbr.rel (0) target = $region5
    $region4: #{tpu_custom_call.1} parent=1 // pred_region
      %s13 = ssub.s32 256, 256
      %14 = vsyncadd [#allocation3], %s13
      %s16 = sshll.u32 [#allocation2], 4
      %s17 = int_to_ptr.vmem [resolvable:$true] %s16
      %19 = dma.hbm_to_vmem [thread:$0]  %s0, 256, %s17, [#allocation3]
    $region5: #{tpu_custom_call.1} parent=1 // pred_fallthru
      _
    // Predicated region
    $region6: #{tpu_custom_call.1} parent=1 // pred_check
      _
    $region7: #{tpu_custom_call.1} parent=1 // pred_check_branch
      %21 = sbr.rel (0) target = $region9
    $region8: #{tpu_custom_call.1} parent=1 // pred_region
      %s23 = ssub.s32 256, 256
      %24 = vsyncadd [#allocation6], %s23
      %s26 = sshll.u32 [#allocation5], 4
      %s27 = int_to_ptr.vmem [resolvable:$true] %s26
      %29 = dma.hbm_to_vmem [thread:$0]  %s1, 256, %s27, [#allocation6]
    $region9: #{tpu_custom_call.1} parent=1 // pred_fallthru
      _
    // Predicated region
    $region10: #{tpu_custom_call.1} parent=1 // pred_check
      _
    $region11: #{tpu_custom_call.1} parent=1 // pred_check_branch
      %31 = sbr.rel (0) target = $region13
    $region12: #{tpu_custom_call.1} parent=1 // pred_region
      %32 = dma.done [#allocation3], 256
    $region13: #{tpu_custom_call.1} parent=1 // pred_fallthru
      _
    // Predicated region
    $region14: #{tpu_custom_call.1} parent=1 // pred_check
      _
    $region15: #{tpu_custom_call.1} parent=1 // pred_check_branch
      %34 = sbr.rel (0) target = $region17
    $region16: #{tpu_custom_call.1} parent=1 // pred_region
      %35 = dma.done [#allocation6], 256
    $region17: #{tpu_custom_call.1} parent=1 // pred_fallthru
      _
    %v36 = vld [vmem:[#allocation2] sm:$0xff]
    %v37 = vld [vmem:[#allocation2 + $0x8] sm:$0xff]
    %v38 = vld [vmem:[#allocation5] sm:$0xff]
    %v39 = vld [vmem:[#allocation5 + $0x8] sm:$0xff]
    %v40 = vsub.f32 %v36, %v38
    %v41 = vsub.f32 %v37, %v39
    %v42 = vand.u32 2147483647, %v40
    %v43 = vand.u32 2147483647, %v41
    %v44 = vmul.f32 %v42, %v42
    %v45 = vmul.f32 %v43, %v43
    %v46 = vmul.f32 %v44, 0.5
    %v47 = vmul.f32 %v45, 0.5
    %v48 = vsub.f32 %v42, 0.5
    %v49 = vsub.f32 %v43, 0.5
    %vm50 = vcmp.lt.f32.partialorder %v42, 1.0
    %vm51 = vcmp.lt.f32.partialorder %v43, 1.0
    %v52 = vsel %vm50, %v46, %v48
    %v53 = vsel %vm51, %v47, %v49
    %54 = vst [vmem:[#allocation7] sm:$0xff] %v52
    %55 = vst [vmem:[#allocation7 + $0x8] sm:$0xff] %v53
    // Predicated region
    $region18: #{tpu_custom_call.1} parent=1 // pred_check
      _
    $region19: #{tpu_custom_call.1} parent=1 // pred_check_branch
      %57 = sbr.rel (0) target = $region21
    $region20: #{tpu_custom_call.1} parent=1 // pred_region
      %s59 = ssub.s32 256, 256
      %60 = vsyncadd [#allocation4], %s59
      %s62 = sshll.u32 [#allocation7], 4
      %s63 = int_to_ptr.vmem [resolvable:$true] %s62
      %65 = dma.vmem_to_hbm [thread:$0]  %s63, 256, %s2, [#allocation4]
    $region21: #{tpu_custom_call.1} parent=1 // pred_fallthru
      _
    // Predicated region
    $region22: #{tpu_custom_call.1} parent=1 // pred_check
      _
    $region23: #{tpu_custom_call.1} parent=1 // pred_check_branch
      %67 = sbr.rel (0) target = $region25
    $region24: #{tpu_custom_call.1} parent=1 // pred_region
      %68 = dma.done [#allocation4], 256
    $region25: #{tpu_custom_call.1} parent=1 // pred_fallthru
      _
    %69 = vsyncpa [#allocation3], 1
    %70 = vsyncpa [#allocation6], 1
    %71 = vsyncpa [#allocation4], 1

</llo_original>
